<compile_context>
chip_gen: v7x
topology: tpu7x:2x2x1
jax: 0.10.0
libtpu: 0.0.40
codegen_flags: <defaults>
</compile_context>

<pallas_src>
import math
import jax
import jax.numpy as jnp
from jax.experimental import pallas as pl
from jax.experimental.pallas import tpu as pltpu

# ----------------------- config (mirrors the PyTorch config) ----------------
HIDDEN_DIM = 32
N_HEADS = 4
HEAD_DIM = HIDDEN_DIM // N_HEADS
BATCH = 2
SEQ = 8
BS = BATCH * SEQ                              # folded (batch*seq) rows
SCALE = math.sqrt(float(HEAD_DIM))            # torch.sqrt(FloatTensor([head_dim]))
NEG_INF = -1e30


def mha_kernel(x_qv_ref, x_kt_ref, w_qv_ref, b_qv_ref, wk_ref, bk_ref,
               wo_ref, bo_ref, hmask_ref, neg_ref, o_ref):
    """Single-step fused MHA, heads stacked along sublanes.

    x_qv_ref  : (4*BS, 2H)  [x_q | x_v] replicated 4x along rows (one copy per head)
    x_kt_ref  : (H, BS)     x_k transposed
    w_qv_ref  : (2H, 2H)    block_diag(Wq^T / scale, Wv^T)
    b_qv_ref  : (1, 2H)     [bq/scale | bv]
    wk_ref    : (H, H)      Wk (used as LHS so K^T comes out directly)
    bk_ref    : (H, BS)     bk pre-broadcast along keys
    wo_ref    : (H, H)      Wo^T
    bo_ref    : (1, H)
    hmask_ref : (4*BS, H)   block-row h keeps only head-h columns (0/1)
    neg_ref   : (4*BS, BS)  additive same-batch mask (0 / -1e30)
    o_ref     : (BS, H)
    """
    H = HIDDEN_DIM

    # 1) fused [Q/scale | V] projection (scale already folded into the q block)
    qv = jnp.dot(x_qv_ref[...], w_qv_ref[...],
                 preferred_element_type=jnp.float32) + b_qv_ref[...]
    # 2) K^T produced directly (no in-kernel transpose): K^T = Wk @ x_k^T + bk
    k_t = jnp.dot(wk_ref[...], x_kt_ref[...],
                  preferred_element_type=jnp.float32) + bk_ref[...]

    hmask = hmask_ref[...]
    # head-stacked block-diagonal Q: row block h keeps only head-h columns
    q_bd = qv[:, 0:H] * hmask                     # (4*BS, H), offset-0 slice is free
    # head-concat V (single 32-lane slice, off the critical path)
    v_all = qv[0:BS, H:2 * H]                     # (BS, H)

    # 3) all heads' scores in ONE push: row block h = Q_h @ K_h^T   (4*BS, BS)
    s = jnp.dot(q_bd, k_t, preferred_element_type=jnp.float32) + neg_ref[...]

    # single numerically-stable softmax over the whole head-stacked slab;
    # divide moved onto the EUP via the approx reciprocal
    m = jnp.max(s, axis=-1, keepdims=True)
    e = jnp.exp(s - m)
    denom = jnp.sum(e, axis=-1, keepdims=True)
    p = e * pl.reciprocal(denom, approx=True)     # dropout = identity at eval

    # 4) all heads' context in ONE push; mask to block-diag, then fold the
    #    head concat by summing the sublane blocks (plain vreg adds).
    r = jnp.dot(p, v_all, preferred_element_type=jnp.float32) * hmask  # (4*BS, H)
    z = r[0:BS]
    for h in range(1, N_HEADS):
        z = z + r[h * BS:(h + 1) * BS]            # (BS, H) head-concat context

    # 5) output projection
    out = jnp.dot(z, wo_ref[...], preferred_element_type=jnp.float32) + bo_ref[...]
    o_ref[...] = out.astype(o_ref.dtype)


def prepare_mha_params(params):
    """Static weight/bias/mask prep, executed ONCE (hoisted out of the call)."""
    H = HIDDEN_DIM
    wq, bq = params["wq"], params["bq"]
    wk, bk = params["wk"], params["bk"]
    wv, bv = params["wv"], params["bv"]
    wo, bo = params["wo"], params["bo"]

    zeros = jnp.zeros((H, H), jnp.float32)
    w_qv = jnp.block([[wq.T / SCALE, zeros],
                      [zeros, wv.T]])                              # (2H, 2H)
    b_qv = jnp.concatenate([bq / SCALE, bv]).reshape(1, 2 * H)     # (1, 2H)

    bk_b = jnp.tile(bk.reshape(H, 1), (1, BS))                     # (H, BS)

    # block-diagonal head mask: row block h keeps head-h columns
    row_h = (jnp.arange(N_HEADS * BS) // BS)[:, None]
    col_h = (jnp.arange(H) // HEAD_DIM)[None, :]
    head_mask = (row_h == col_h).astype(jnp.float32)               # (4*BS, H)

    # additive same-batch mask for the folded-batch attention
    q_b = ((jnp.arange(N_HEADS * BS) % BS) // SEQ)[:, None]
    k_b = (jnp.arange(BS) // SEQ)[None, :]
    neg = jnp.where(q_b == k_b, 0.0, NEG_INF).astype(jnp.float32)  # (4*BS, BS)

    return {
        "w_qv": w_qv, "b_qv": b_qv,
        "wk": wk, "bk_b": bk_b,
        "wo_t": wo.T, "bo_row": bo.reshape(1, H),
        "head_mask": head_mask, "neg": neg,
    }


@jax.jit
def multi_head_attention(query, key, value, prep):
    """query/key/value: (B, S, H) float32. prep: output of prepare_mha_params."""
    B, S, H = query.shape
    q2d = query.reshape(B * S, H)
    k2d = key.reshape(B * S, H)
    v2d = value.reshape(B * S, H)

    # per-call activation plumbing: [q | v] replicated per head (rows), k transposed
    x_qv = jnp.tile(jnp.concatenate([q2d, v2d], axis=-1), (N_HEADS, 1))  # (4*BS, 2H)
    x_kt = k2d.T                                                          # (H, BS)

    def spec(shape):
        return pl.BlockSpec(shape, lambda i: (0, 0))

    out = pl.pallas_call(
        mha_kernel,
        out_shape=jax.ShapeDtypeStruct((B * S, H), query.dtype),
        grid_spec=pltpu.PrefetchScalarGridSpec(
            num_scalar_prefetch=0,
            grid=(1,),                      # whole problem fits VMEM in one step
            in_specs=[spec(x_qv.shape), spec(x_kt.shape),
                      spec(prep["w_qv"].shape), spec(prep["b_qv"].shape),
                      spec(prep["wk"].shape), spec(prep["bk_b"].shape),
                      spec(prep["wo_t"].shape), spec(prep["bo_row"].shape),
                      spec(prep["head_mask"].shape), spec(prep["neg"].shape)],
            out_specs=spec((B * S, H)),
        ),
        compiler_params=pltpu.CompilerParams(
            dimension_semantics=("arbitrary",)),
    )(x_qv, x_kt, prep["w_qv"], prep["b_qv"], prep["wk"], prep["bk_b"],
      prep["wo_t"], prep["bo_row"], prep["head_mask"], prep["neg"])

    return out.reshape(B, S, H)


def reference_mha(query, key, value, params):
    """Pure-JAX reference replicating std_forward (eval mode, no mask)."""
    B, S, H = query.shape

    def lin(x, w, b):
        return x @ w.T + b

    q = lin(query, params["wq"], params["bq"]).reshape(B, S, N_HEADS, HEAD_DIM).transpose(0, 2, 1, 3)
    k = lin(key, params["wk"], params["bk"]).reshape(B, S, N_HEADS, HEAD_DIM).transpose(0, 2, 1, 3)
    v = lin(value, params["wv"], params["bv"]).reshape(B, S, N_HEADS, HEAD_DIM).transpose(0, 2, 1, 3)
    score = jnp.einsum("bhqd,bhkd->bhqk", q, k) / SCALE
    attn = jax.nn.softmax(score, axis=-1)
    x = jnp.einsum("bhqk,bhkd->bhqd", attn, v)
    x = x.transpose(0, 2, 1, 3).reshape(B, S, H)
    return lin(x, params["wo"], params["bo"])


def init_params(key):
    """Deterministic Linear(H, H) x4 init (uniform, like PyTorch's default range)."""
    keys = jax.random.split(key, 8)
    bound = 1.0 / math.sqrt(HIDDEN_DIM)

    def u(k, shape):
        return jax.random.uniform(k, shape, jnp.float32, -bound, bound)

    return {
        "wq": u(keys[0], (HIDDEN_DIM, HIDDEN_DIM)), "bq": u(keys[1], (HIDDEN_DIM,)),
        "wk": u(keys[2], (HIDDEN_DIM, HIDDEN_DIM)), "bk": u(keys[3], (HIDDEN_DIM,)),
        "wv": u(keys[4], (HIDDEN_DIM, HIDDEN_DIM)), "bv": u(keys[5], (HIDDEN_DIM,)),
        "wo": u(keys[6], (HIDDEN_DIM, HIDDEN_DIM)), "bo": u(keys[7], (HIDDEN_DIM,)),
    }


if __name__ == "__main__":
    root = jax.random.PRNGKey(0)
    k_params, kq, kk, kv = jax.random.split(root, 4)

    params = init_params(k_params)
    prepared = prepare_mha_params(params)      # hoisted: built once, reused per call

    query = jax.random.normal(kq, (BATCH, SEQ, HIDDEN_DIM), jnp.float32)
    key_in = jax.random.normal(kk, (BATCH, SEQ, HIDDEN_DIM), jnp.float32)
    value = jax.random.normal(kv, (BATCH, SEQ, HIDDEN_DIM), jnp.float32)

    out = multi_head_attention(query, key_in, value, prepared)
    out = jax.block_until_ready(out)

    ref = jax.block_until_ready(reference_mha(query, key_in, value, params))
    assert out.shape == (BATCH, SEQ, HIDDEN_DIM)
    # slightly relaxed tolerance: softmax denom uses the EUP approx reciprocal
    assert jnp.allclose(out, ref, atol=2e-3, rtol=2e-3), "mismatch vs reference"

    print("KERNEL_OK")
</pallas_src>

<mosaic_0001>
module attributes {stable_mosaic.version = 11 : i64} {
  func.func @mha_kernel(%arg0: i32, %arg1: memref<64x64xf32, #tpu.memory_space<vmem>>, %arg2: memref<32x16xf32, #tpu.memory_space<vmem>>, %arg3: memref<64x64xf32, #tpu.memory_space<vmem>>, %arg4: memref<1x64xf32, #tpu.memory_space<vmem>>, %arg5: memref<32x32xf32, #tpu.memory_space<vmem>>, %arg6: memref<32x16xf32, #tpu.memory_space<vmem>>, %arg7: memref<32x32xf32, #tpu.memory_space<vmem>>, %arg8: memref<1x32xf32, #tpu.memory_space<vmem>>, %arg9: memref<64x32xf32, #tpu.memory_space<vmem>>, %arg10: memref<64x16xf32, #tpu.memory_space<vmem>>, %arg11: memref<16x32xf32, #tpu.memory_space<vmem>>) attributes {dimension_semantics = [#tpu.dimension_semantics<arbitrary>], iteration_bounds = array<i64: 1>, scalar_prefetch = 0 : i64, scratch_operands = 0 : i64, tpu.core_type = #tpu.core_type<tc>, window_params = [{pipeline_mode = #tpu.pipeline_mode<synchronous>, transform_indices = @transform_0, window_bounds = array<i64: 64, 64>}, {pipeline_mode = #tpu.pipeline_mode<synchronous>, transform_indices = @transform_1, window_bounds = array<i64: 32, 16>}, {pipeline_mode = #tpu.pipeline_mode<synchronous>, transform_indices = @transform_2, window_bounds = array<i64: 64, 64>}, {pipeline_mode = #tpu.pipeline_mode<synchronous>, transform_indices = @transform_3, window_bounds = array<i64: 1, 64>}, {pipeline_mode = #tpu.pipeline_mode<synchronous>, transform_indices = @transform_4, window_bounds = array<i64: 32, 32>}, {pipeline_mode = #tpu.pipeline_mode<synchronous>, transform_indices = @transform_5, window_bounds = array<i64: 32, 16>}, {pipeline_mode = #tpu.pipeline_mode<synchronous>, transform_indices = @transform_6, window_bounds = array<i64: 32, 32>}, {pipeline_mode = #tpu.pipeline_mode<synchronous>, transform_indices = @transform_7, window_bounds = array<i64: 1, 32>}, {pipeline_mode = #tpu.pipeline_mode<synchronous>, transform_indices = @transform_8, window_bounds = array<i64: 64, 32>}, {pipeline_mode = #tpu.pipeline_mode<synchronous>, transform_indices = @transform_9, window_bounds = array<i64: 64, 16>}, {pipeline_mode = #tpu.pipeline_mode<synchronous>, transform_indices = @transform_10, window_bounds = array<i64: 16, 32>}]} {
    %c0 = arith.constant 0 : index
    %c0_0 = arith.constant 0 : index
    %0 = vector.load %arg1[%c0, %c0_0] : memref<64x64xf32, #tpu.memory_space<vmem>>, vector<64x64xf32>
    %c0_1 = arith.constant 0 : index
    %c0_2 = arith.constant 0 : index
    %1 = vector.load %arg3[%c0_1, %c0_2] : memref<64x64xf32, #tpu.memory_space<vmem>>, vector<64x64xf32>
    %cst = arith.constant dense<0.000000e+00> : vector<64x64xf32>
    %2 = tpu.matmul %0, %1, %cst {dimension_numbers = #tpu.dot_dimension_numbers<[1], [0], [0], [1], [0, 0, 1, 1], [], []>} : vector<64x64xf32>, vector<64x64xf32>, vector<64x64xf32> -> vector<64x64xf32>
    %c0_3 = arith.constant 0 : index
    %c0_4 = arith.constant 0 : index
    %3 = vector.load %arg4[%c0_3, %c0_4] : memref<1x64xf32, #tpu.memory_space<vmem>>, vector<1x64xf32>
    %4 = vector.broadcast %3 : vector<1x64xf32> to vector<64x64xf32>
    %5 = arith.addf %2, %4 : vector<64x64xf32>
    %c0_5 = arith.constant 0 : index
    %c0_6 = arith.constant 0 : index
    %6 = vector.load %arg5[%c0_5, %c0_6] : memref<32x32xf32, #tpu.memory_space<vmem>>, vector<32x32xf32>
    %c0_7 = arith.constant 0 : index
    %c0_8 = arith.constant 0 : index
    %7 = vector.load %arg2[%c0_7, %c0_8] : memref<32x16xf32, #tpu.memory_space<vmem>>, vector<32x16xf32>
    %cst_9 = arith.constant dense<0.000000e+00> : vector<32x16xf32>
    %8 = tpu.matmul %6, %7, %cst_9 {dimension_numbers = #tpu.dot_dimension_numbers<[1], [0], [0], [1], [0, 0, 1, 1], [], []>} : vector<32x32xf32>, vector<32x16xf32>, vector<32x16xf32> -> vector<32x16xf32>
    %c0_10 = arith.constant 0 : index
    %c0_11 = arith.constant 0 : index
    %9 = vector.load %arg6[%c0_10, %c0_11] : memref<32x16xf32, #tpu.memory_space<vmem>>, vector<32x16xf32>
    %10 = arith.addf %8, %9 : vector<32x16xf32>
    %c0_12 = arith.constant 0 : index
    %c0_13 = arith.constant 0 : index
    %11 = vector.load %arg9[%c0_12, %c0_13] : memref<64x32xf32, #tpu.memory_space<vmem>>, vector<64x32xf32>
    %12 = vector.extract_strided_slice %5 {offsets = [0, 0], sizes = [64, 32], strides = [1, 1]} : vector<64x64xf32> to vector<64x32xf32>
    %13 = arith.mulf %12, %11 : vector<64x32xf32>
    %14 = vector.extract_strided_slice %5 {offsets = [0, 32], sizes = [16, 32], strides = [1, 1]} : vector<64x64xf32> to vector<16x32xf32>
    %cst_14 = arith.constant dense<0.000000e+00> : vector<64x16xf32>
    %15 = tpu.matmul %13, %10, %cst_14 {dimension_numbers = #tpu.dot_dimension_numbers<[1], [0], [0], [1], [0, 0, 1, 1], [], []>} : vector<64x32xf32>, vector<32x16xf32>, vector<64x16xf32> -> vector<64x16xf32>
    %c0_15 = arith.constant 0 : index
    %c0_16 = arith.constant 0 : index
    %16 = vector.load %arg10[%c0_15, %c0_16] : memref<64x16xf32, #tpu.memory_space<vmem>>, vector<64x16xf32>
    %17 = arith.addf %15, %16 : vector<64x16xf32>
    %cst_17 = arith.constant dense<0xFF800000> : vector<64xf32>
    %18 = vector.multi_reduction <maximumf>, %17, %cst_17 [1] : vector<64x16xf32> to vector<64xf32>
    %19 = vector.shape_cast %18 : vector<64xf32> to vector<64x1xf32>
    %20 = vector.broadcast %19 : vector<64x1xf32> to vector<64x16xf32>
    %21 = arith.subf %17, %20 : vector<64x16xf32>
    %22 = math.exp %21 : vector<64x16xf32>
    %cst_18 = arith.constant dense<0.000000e+00> : vector<64xf32>
    %23 = vector.multi_reduction <add>, %22, %cst_18 [1] : vector<64x16xf32> to vector<64xf32>
    %24 = vector.shape_cast %23 : vector<64xf32> to vector<64x1xf32>
    %25 = tpu.reciprocal %24 {approx = true} : vector<64x1xf32> -> vector<64x1xf32>
    %26 = vector.broadcast %25 : vector<64x1xf32> to vector<64x16xf32>
    %27 = arith.mulf %22, %26 : vector<64x16xf32>
    %cst_19 = arith.constant dense<0.000000e+00> : vector<64x32xf32>
    %28 = tpu.matmul %27, %14, %cst_19 {dimension_numbers = #tpu.dot_dimension_numbers<[1], [0], [0], [1], [0, 0, 1, 1], [], []>} : vector<64x16xf32>, vector<16x32xf32>, vector<64x32xf32> -> vector<64x32xf32>
    %29 = arith.mulf %28, %11 : vector<64x32xf32>
    %30 = vector.extract_strided_slice %29 {offsets = [0, 0], sizes = [16, 32], strides = [1, 1]} : vector<64x32xf32> to vector<16x32xf32>
    %31 = vector.extract_strided_slice %29 {offsets = [16, 0], sizes = [16, 32], strides = [1, 1]} : vector<64x32xf32> to vector<16x32xf32>
    %32 = arith.addf %30, %31 : vector<16x32xf32>
    %33 = vector.extract_strided_slice %29 {offsets = [32, 0], sizes = [16, 32], strides = [1, 1]} : vector<64x32xf32> to vector<16x32xf32>
    %34 = arith.addf %32, %33 : vector<16x32xf32>
    %35 = vector.extract_strided_slice %29 {offsets = [48, 0], sizes = [16, 32], strides = [1, 1]} : vector<64x32xf32> to vector<16x32xf32>
    %36 = arith.addf %34, %35 : vector<16x32xf32>
    %c0_20 = arith.constant 0 : index
    %c0_21 = arith.constant 0 : index
    %37 = vector.load %arg7[%c0_20, %c0_21] : memref<32x32xf32, #tpu.memory_space<vmem>>, vector<32x32xf32>
    %cst_22 = arith.constant dense<0.000000e+00> : vector<16x32xf32>
    %38 = tpu.matmul %36, %37, %cst_22 {dimension_numbers = #tpu.dot_dimension_numbers<[1], [0], [0], [1], [0, 0, 1, 1], [], []>} : vector<16x32xf32>, vector<32x32xf32>, vector<16x32xf32> -> vector<16x32xf32>
    %c0_23 = arith.constant 0 : index
    %c0_24 = arith.constant 0 : index
    %39 = vector.load %arg8[%c0_23, %c0_24] : memref<1x32xf32, #tpu.memory_space<vmem>>, vector<1x32xf32>
    %40 = vector.broadcast %39 : vector<1x32xf32> to vector<16x32xf32>
    %41 = arith.addf %38, %40 : vector<16x32xf32>
    %c0_25 = arith.constant 0 : index
    %c0_26 = arith.constant 0 : index
    %42 = vector.load %arg11[%c0_25, %c0_26] : memref<16x32xf32, #tpu.memory_space<vmem>>, vector<16x32xf32>
    tpu.vector_store %arg11[%c0_25, %c0_26], %41 {strides = array<i32>} : memref<16x32xf32, #tpu.memory_space<vmem>>, vector<16x32xf32>,
    return
  }
  func.func @transform_0(%arg0: i32) -> (i32, i32) {
    %c0_i32 = arith.constant 0 : i32
    %c0_i32_0 = arith.constant 0 : i32
    %c0_i32_1 = arith.constant 0 : i32
    return %c0_i32, %c0_i32_0 : i32, i32
  }
  func.func @transform_1(%arg0: i32) -> (i32, i32) {
    %c0_i32 = arith.constant 0 : i32
    %c0_i32_0 = arith.constant 0 : i32
    %c0_i32_1 = arith.constant 0 : i32
    return %c0_i32, %c0_i32_0 : i32, i32
  }
  func.func @transform_2(%arg0: i32) -> (i32, i32) {
    %c0_i32 = arith.constant 0 : i32
    %c0_i32_0 = arith.constant 0 : i32
    %c0_i32_1 = arith.constant 0 : i32
    return %c0_i32, %c0_i32_0 : i32, i32
  }
  func.func @transform_3(%arg0: i32) -> (i32, i32) {
    %c0_i32 = arith.constant 0 : i32
    %c0_i32_0 = arith.constant 0 : i32
    %c0_i32_1 = arith.constant 0 : i32
    return %c0_i32, %c0_i32_0 : i32, i32
  }
  func.func @transform_4(%arg0: i32) -> (i32, i32) {
    %c0_i32 = arith.constant 0 : i32
    %c0_i32_0 = arith.constant 0 : i32
    %c0_i32_1 = arith.constant 0 : i32
    return %c0_i32, %c0_i32_0 : i32, i32
  }
  func.func @transform_5(%arg0: i32) -> (i32, i32) {
    %c0_i32 = arith.constant 0 : i32
    %c0_i32_0 = arith.constant 0 : i32
    %c0_i32_1 = arith.constant 0 : i32
    return %c0_i32, %c0_i32_0 : i32, i32
  }
  func.func @transform_6(%arg0: i32) -> (i32, i32) {
    %c0_i32 = arith.constant 0 : i32
    %c0_i32_0 = arith.constant 0 : i32
    %c0_i32_1 = arith.constant 0 : i32
    return %c0_i32, %c0_i32_0 : i32, i32
  }
  func.func @transform_7(%arg0: i32) -> (i32, i32) {
    %c0_i32 = arith.constant 0 : i32
    %c0_i32_0 = arith.constant 0 : i32
    %c0_i32_1 = arith.constant 0 : i32
    return %c0_i32, %c0_i32_0 : i32, i32
  }
  func.func @transform_8(%arg0: i32) -> (i32, i32) {
    %c0_i32 = arith.constant 0 : i32
    %c0_i32_0 = arith.constant 0 : i32
    %c0_i32_1 = arith.constant 0 : i32
    return %c0_i32, %c0_i32_0 : i32, i32
  }
  func.func @transform_9(%arg0: i32) -> (i32, i32) {
    %c0_i32 = arith.constant 0 : i32
    %c0_i32_0 = arith.constant 0 : i32
    %c0_i32_1 = arith.constant 0 : i32
    return %c0_i32, %c0_i32_0 : i32, i32
  }
  func.func @transform_10(%arg0: i32) -> (i32, i32) {
    %c0_i32 = arith.constant 0 : i32
    %c0_i32_0 = arith.constant 0 : i32
    %c0_i32_1 = arith.constant 0 : i32
    return %c0_i32, %c0_i32_0 : i32, i32
  }
}

</mosaic_0001>

<llo_original>
// kernel: multi_head_attention.1
$region0: #{multi_head_attention.1}
  #allocation0 [shape = 'u32[]', space=smem, size = 0x4, offset = 0x4, fixed_abs, tag = 'smem constant byte address 0x4 - core index']
  #allocation1 [shape = 'u32[144,128]{1,0:T(1,128)}', space=vmem, size = 0x12000, scoped, tag = 'internal scratch']
  %s0 = inlined_call_operand.vmem [shape: f32[64,64], index: 0, kind: input, shape index: {}]
  %s1 = inlined_call_operand.vmem [shape: f32[32,16], index: 1, kind: input, shape index: {}]
  %s2 = inlined_call_operand.vmem [shape: f32[64,64], index: 2, kind: input, shape index: {}]
  %s3 = inlined_call_operand.vmem [shape: f32[1,64], index: 3, kind: input, shape index: {}]
  %s4 = inlined_call_operand.vmem [shape: f32[32,32], index: 4, kind: input, shape index: {}]
  %s5 = inlined_call_operand.vmem [shape: f32[32,16], index: 5, kind: input, shape index: {}]
  %s6 = inlined_call_operand.vmem [shape: f32[32,32], index: 6, kind: input, shape index: {}]
  %s7 = inlined_call_operand.vmem [shape: f32[1,32], index: 7, kind: input, shape index: {}]
  %s8 = inlined_call_operand.vmem [shape: f32[64,32], index: 8, kind: input, shape index: {}]
  %s9 = inlined_call_operand.vmem [shape: f32[64,16], index: 9, kind: input, shape index: {}]
  %s10 = inlined_call_operand.hbm [shape: f32[16,32], index: 10, kind: output, shape index: {}]
  %s11 = sld [smem:[#allocation0]]
  $region50: #{multi_head_attention.1} parent=0
    _
  %s13 = ssub.s32 1, %s11
  %s14 = scalar_select 0, %s13, %s11
  $region1: #{multi_head_attention.1} parent=0
    #allocation2 [shape = 'u8[8192]{0}', space=vmem, size = 0x2000, scoped, tag = 'output window, operand 0, single buffered']
    #allocation3 [shape = 's32[1]{0}', space=sflag, size = 0x4, scoped, tag = 'scoped memory for multi_head_attention.1']
    %15 = vsyncpa [#allocation3], 0
    // Predicated region
    $region2: #{multi_head_attention.1} parent=1 // pred_check
      _
    $region3: #{multi_head_attention.1} parent=1 // pred_check_branch
      %17 = sbr.rel (0) target = $region5
    $region4: #{multi_head_attention.1} parent=1 // pred_region
      _
    $region5: #{multi_head_attention.1} parent=1 // pred_fallthru
      _
    // Predicated region
    $region6: #{multi_head_attention.1} parent=1 // pred_check
      _
    $region7: #{multi_head_attention.1} parent=1 // pred_check_branch
      %19 = sbr.rel (0) target = $region9
    $region8: #{multi_head_attention.1} parent=1 // pred_region
      _
    $region9: #{multi_head_attention.1} parent=1 // pred_fallthru
      _
    // Predicated region
    $region10: #{multi_head_attention.1} parent=1 // pred_check
      _
    $region11: #{multi_head_attention.1} parent=1 // pred_check_branch
      %21 = sbr.rel (0) target = $region13
    $region12: #{multi_head_attention.1} parent=1 // pred_region
      _
    $region13: #{multi_head_attention.1} parent=1 // pred_fallthru
      _
    // Predicated region
    $region14: #{multi_head_attention.1} parent=1 // pred_check
      _
    $region15: #{multi_head_attention.1} parent=1 // pred_check_branch
      %23 = sbr.rel (0) target = $region17
    $region16: #{multi_head_attention.1} parent=1 // pred_region
      _
    $region17: #{multi_head_attention.1} parent=1 // pred_fallthru
      _
    // Predicated region
    $region18: #{multi_head_attention.1} parent=1 // pred_check
      _
    $region19: #{multi_head_attention.1} parent=1 // pred_check_branch
      %25 = sbr.rel (0) target = $region21
    $region20: #{multi_head_attention.1} parent=1 // pred_region
      _
    $region21: #{multi_head_attention.1} parent=1 // pred_fallthru
      _
    // Predicated region
    $region22: #{multi_head_attention.1} parent=1 // pred_check
      _
    $region23: #{multi_head_attention.1} parent=1 // pred_check_branch
      %27 = sbr.rel (0) target = $region25
    $region24: #{multi_head_attention.1} parent=1 // pred_region
      _
    $region25: #{multi_head_attention.1} parent=1 // pred_fallthru
      _
    // Predicated region
    $region26: #{multi_head_attention.1} parent=1 // pred_check
      _
    $region27: #{multi_head_attention.1} parent=1 // pred_check_branch
      %29 = sbr.rel (0) target = $region29
    $region28: #{multi_head_attention.1} parent=1 // pred_region
      _
    $region29: #{multi_head_attention.1} parent=1 // pred_fallthru
      _
    // Predicated region
    $region30: #{multi_head_attention.1} parent=1 // pred_check
      _
    $region31: #{multi_head_attention.1} parent=1 // pred_check_branch
      %31 = sbr.rel (0) target = $region33
    $region32: #{multi_head_attention.1} parent=1 // pred_region
      _
    $region33: #{multi_head_attention.1} parent=1 // pred_fallthru
      _
    // Predicated region
    $region34: #{multi_head_attention.1} parent=1 // pred_check
      _
    $region35: #{multi_head_attention.1} parent=1 // pred_check_branch
      %33 = sbr.rel (0) target = $region37
    $region36: #{multi_head_attention.1} parent=1 // pred_region
      _
    $region37: #{multi_head_attention.1} parent=1 // pred_fallthru
      _
    // Predicated region
    $region38: #{multi_head_attention.1} parent=1 // pred_check
      _
    $region39: #{multi_head_attention.1} parent=1 // pred_check_branch
      %35 = sbr.rel (0) target = $region41
    $region40: #{multi_head_attention.1} parent=1 // pred_region
      _
    $region41: #{multi_head_attention.1} parent=1 // pred_fallthru
      _
    %v36 = vld [vmem:[%s0] sm:$0xff]
    %v37 = vld [vmem:[%s0 + $0x8] sm:$0xff]
    %v38 = vld [vmem:[%s0 + $0x10] sm:$0xff]
    %v39 = vld [vmem:[%s0 + $0x18] sm:$0xff]
    %v40 = vld [vmem:[%s0 + $0x20] sm:$0xff]
    %v41 = vld [vmem:[%s0 + $0x28] sm:$0xff]
    %v42 = vld [vmem:[%s0 + $0x30] sm:$0xff]
    %v43 = vld [vmem:[%s0 + $0x38] sm:$0xff]
    %v44 = vld [vmem:[%s2] sm:$0xff]
    %v45 = vld [vmem:[%s2 + $0x8] sm:$0xff]
    %v46 = vld [vmem:[%s2 + $0x10] sm:$0xff]
    %v47 = vld [vmem:[%s2 + $0x18] sm:$0xff]
    %v48 = vld [vmem:[%s2 + $0x20] sm:$0xff]
    %v49 = vld [vmem:[%s2 + $0x28] sm:$0xff]
    %v50 = vld [vmem:[%s2 + $0x30] sm:$0xff]
    %v51 = vld [vmem:[%s2 + $0x38] sm:$0xff]
    %v52 = vld [vmem:[%s3] sm:$0x1]
    %v54 = vlaneseq
    %v55 = vshrl.u32 %v54, 7
    %v56 = vsub.s32 0, %v55
    %v57 = vrot.slane %v52, %v56
    %vm59 = vcmask 523264
    %v61 = vsel %vm59, %v36, 0
    %v64 = vsel %vm59, %v37, 0
    %v67 = vsel %vm59, %v38, 0
    %v70 = vsel %vm59, %v39, 0
    %v73 = vsel %vm59, %v40, 0
    %v76 = vsel %vm59, %v41, 0
    %v79 = vsel %vm59, %v42, 0
    %v82 = vsel %vm59, %v43, 0
    %84 = vmatprep.subr.mxu0 0.0
    %85 = vmatpush1.msra.mxu0 %v44
    %86 = vmatprep.subr.mxu0 0.0
    %87 = vmatpush1.msra.mxu0 %v45
    %88 = vmatprep.subr.mxu0 0.0
    %89 = vmatpush1.msra.mxu0 %v46
    %90 = vmatprep.subr.mxu0 0.0
    %91 = vmatpush1.msra.mxu0 %v47
    %92 = vmatprep.subr.mxu0 0.0
    %93 = vmatpush1.msra.mxu0 %v48
    %94 = vmatprep.subr.mxu0 0.0
    %95 = vmatpush1.msra.mxu0 %v49
    %96 = vmatprep.subr.mxu0 0.0
    %97 = vmatpush1.msra.mxu0 %v50
    %98 = vmatprep.subr.mxu0 0.0
    %99 = vmatpush1.msra.mxu0 %v51
    %100 = vmatprep.subr.mxu0 0.0
    %101 = vmatpush1.msra.mxu0 0.0
    %102 = vmatprep.subr.mxu0 0.0
    %103 = vmatpush1.msra.mxu0 0.0
    %104 = vmatprep.subr.mxu0 0.0
    %105 = vmatpush1.msra.mxu0 0.0
    %106 = vmatprep.subr.mxu0 0.0
    %107 = vmatpush1.msra.mxu0 0.0
    %108 = vmatprep.subr.mxu0 0.0
    %109 = vmatpush1.msra.mxu0 0.0
    %110 = vmatprep.subr.mxu0 0.0
    %111 = vmatpush1.msra.mxu0 0.0
    %112 = vmatprep.subr.mxu0 0.0
    %113 = vmatpush1.msra.mxu0 0.0
    %114 = vmatprep.subr.mxu0 0.0
    %115 = vmatpush1.msra.mxu0 0.0
    %116 = vmatprep.subr.mxu0 0.0
    %117 = vmatpush1.msra.mxu0 0.0
    %118 = vmatprep.subr.mxu0 0.0
    %119 = vmatpush1.msra.mxu0 0.0
    %120 = vmatprep.subr.mxu0 0.0
    %121 = vmatpush1.msra.mxu0 0.0
    %122 = vmatprep.subr.mxu0 0.0
    %123 = vmatpush1.msra.mxu0 0.0
    %124 = vmatprep.subr.mxu0 0.0
    %125 = vmatpush1.msra.mxu0 0.0
    %126 = vmatprep.subr.mxu0 0.0
    %127 = vmatpush1.msra.mxu0 0.0
    %128 = vmatprep.subr.mxu0 0.0
    %129 = vmatpush1.msra.mxu0 0.0
    %130 = vmatprep.subr.mxu0 0.0
    %131 = vmatpush1.msra.mxu0 0.0
    %132 = vmatprep.subr.mxu0 0.0
    %133 = vmatpush1.msra.mxu0 0.0
    %134 = vmatprep.subr.mxu0 0.0
    %135 = vmatpush1.msra.mxu0 0.0
    %136 = vmatprep.subr.mxu0 0.0
    %137 = vmatpush1.msra.mxu0 0.0
    %138 = vmatprep.subr.mxu0 0.0
    %139 = vmatpush1.msra.mxu0 0.0
    %140 = vmatprep.subr.mxu0 0.0
    %141 = vmatpush1.msra.mxu0 0.0
    %142 = vmatprep.subr.mxu0 0.0
    %143 = vmatpush1.msra.mxu0 0.0
    %144 = vmatprep.subr.mxu0 0.0
    %145 = vmatpush1.msra.mxu0 0.0
    %146 = vmatprep.subr.mxu0 0.0
    %147 = vmatpush1.msra.mxu0 0.0
    %148 = vmatprep.mubr.f32.mxu0 0.0
    %149 = vmatmul.mubr.f32.gmra.mrb[0].mxu0 %v61
    %v150 = vpop.f32.mrb[0].mxu0
    %v151 = vadd.f32 %v57, %v150
    %v152 = vpop.f32.mrb[0].mxu0
    %153 = vmatprep.mubr.f32.mxu0 0.0
    %154 = vmatmul.mubr.f32.gmra.mrb[0].mxu0 %v64
    %v155 = vpop.f32.mrb[0].mxu0
    %v156 = vadd.f32 %v57, %v155
    %v157 = vpop.f32.mrb[0].mxu0
    %158 = vmatprep.mubr.f32.mxu0 0.0
    %159 = vmatmul.mubr.f32.gmra.mrb[0].mxu0 %v67
    %v160 = vpop.f32.mrb[0].mxu0
    %v161 = vadd.f32 %v57, %v160
    %v162 = vpop.f32.mrb[0].mxu0
    %163 = vmatprep.mubr.f32.mxu0 0.0
    %164 = vmatmul.mubr.f32.gmra.mrb[0].mxu0 %v70
    %v165 = vpop.f32.mrb[0].mxu0
    %v166 = vadd.f32 %v57, %v165
    %v167 = vpop.f32.mrb[0].mxu0
    %168 = vmatprep.mubr.f32.mxu0 0.0
    %169 = vmatmul.mubr.f32.gmra.mrb[0].mxu0 %v73
    %v170 = vpop.f32.mrb[0].mxu0
    %v171 = vadd.f32 %v57, %v170
    %v172 = vpop.f32.mrb[0].mxu0
    %173 = vmatprep.mubr.f32.mxu0 0.0
    %174 = vmatmul.mubr.f32.gmra.mrb[0].mxu0 %v76
    %v175 = vpop.f32.mrb[0].mxu0
    %v176 = vadd.f32 %v57, %v175
    %v177 = vpop.f32.mrb[0].mxu0
    %178 = vmatprep.mubr.f32.mxu0 0.0
    %179 = vmatmul.mubr.f32.gmra.mrb[0].mxu0 %v79
    %v180 = vpop.f32.mrb[0].mxu0
    %v181 = vadd.f32 %v57, %v180
    %v182 = vpop.f32.mrb[0].mxu0
    %183 = vmatprep.mubr.f32.mxu0 0.0
    %184 = vmatmul.mubr.f32.gmra.mrb[0].mxu0 %v82
    %v185 = vpop.f32.mrb[0].mxu0
    %v186 = vadd.f32 %v57, %v185
    %v187 = vpop.f32.mrb[0].mxu0
    %188 = vdwg.mxu0
    %v189 = vld [vmem:[%s4] sm:$0xff]
    %v190 = vld [vmem:[%s4 + $0x8] sm:$0xff]
    %v191 = vld [vmem:[%s4 + $0x10] sm:$0xff]
    %v192 = vld [vmem:[%s4 + $0x18] sm:$0xff]
    %v193 = vld [vmem:[%s1] sm:$0xff]
    %v194 = vld [vmem:[%s1 + $0x8] sm:$0xff]
    %v195 = vld [vmem:[%s1 + $0x10] sm:$0xff]
    %v196 = vld [vmem:[%s1 + $0x18] sm:$0xff]
    %v197 = vld [vmem:[%s5] sm:$0xff]
    %v198 = vld [vmem:[%s5 + $0x8] sm:$0xff]
    %v199 = vld [vmem:[%s5 + $0x10] sm:$0xff]
    %v200 = vld [vmem:[%s5 + $0x18] sm:$0xff]
    %vm201 = vcmask 261120
    %v203 = vsel %vm201, %v189, 0
    %v206 = vsel %vm201, %v190, 0
    %v209 = vsel %vm201, %v191, 0
    %v212 = vsel %vm201, %v192, 0
    %214 = vmatprep.subr.mxu0 0.0
    %215 = vmatpush1.msra.mxu0 %v193
    %216 = vmatprep.subr.mxu0 0.0
    %217 = vmatpush1.msra.mxu0 %v194
    %218 = vmatprep.subr.mxu0 0.0
    %219 = vmatpush1.msra.mxu0 %v195
    %220 = vmatprep.subr.mxu0 0.0
    %221 = vmatpush1.msra.mxu0 %v196
    %222 = vmatprep.subr.mxu0 0.0
    %223 = vmatpush1.msra.mxu0 0.0
    %224 = vmatprep.subr.mxu0 0.0
    %225 = vmatpush1.msra.mxu0 0.0
    %226 = vmatprep.subr.mxu0 0.0
    %227 = vmatpush1.msra.mxu0 0.0
    %228 = vmatprep.subr.mxu0 0.0
    %229 = vmatpush1.msra.mxu0 0.0
    %230 = vmatprep.subr.mxu0 0.0
    %231 = vmatpush1.msra.mxu0 0.0
    %232 = vmatprep.subr.mxu0 0.0
    %233 = vmatpush1.msra.mxu0 0.0
    %234 = vmatprep.subr.mxu0 0.0
    %235 = vmatpush1.msra.mxu0 0.0
    %236 = vmatprep.subr.mxu0 0.0
    %237 = vmatpush1.msra.mxu0 0.0
    %238 = vmatprep.subr.mxu0 0.0
    %239 = vmatpush1.msra.mxu0 0.0
    %240 = vmatprep.subr.mxu0 0.0
    %241 = vmatpush1.msra.mxu0 0.0
    %242 = vmatprep.subr.mxu0 0.0
    %243 = vmatpush1.msra.mxu0 0.0
    %244 = vmatprep.subr.mxu0 0.0
    %245 = vmatpush1.msra.mxu0 0.0
    %246 = vmatprep.subr.mxu0 0.0
    %247 = vmatpush1.msra.mxu0 0.0
    %248 = vmatprep.subr.mxu0 0.0
    %249 = vmatpush1.msra.mxu0 0.0
    %250 = vmatprep.subr.mxu0 0.0
    %251 = vmatpush1.msra.mxu0 0.0
    %252 = vmatprep.subr.mxu0 0.0
    %253 = vmatpush1.msra.mxu0 0.0
    %254 = vmatprep.subr.mxu0 0.0
    %255 = vmatpush1.msra.mxu0 0.0
    %256 = vmatprep.subr.mxu0 0.0
    %257 = vmatpush1.msra.mxu0 0.0
    %258 = vmatprep.subr.mxu0 0.0
    %259 = vmatpush1.msra.mxu0 0.0
    %260 = vmatprep.subr.mxu0 0.0
    %261 = vmatpush1.msra.mxu0 0.0
    %262 = vmatprep.subr.mxu0 0.0
    %263 = vmatpush1.msra.mxu0 0.0
    %264 = vmatprep.subr.mxu0 0.0
    %265 = vmatpush1.msra.mxu0 0.0
    %266 = vmatprep.subr.mxu0 0.0
    %267 = vmatpush1.msra.mxu0 0.0
    %268 = vmatprep.subr.mxu0 0.0
    %269 = vmatpush1.msra.mxu0 0.0
    %270 = vmatprep.subr.mxu0 0.0
    %271 = vmatpush1.msra.mxu0 0.0
    %272 = vmatprep.subr.mxu0 0.0
    %273 = vmatpush1.msra.mxu0 0.0
    %274 = vmatprep.subr.mxu0 0.0
    %275 = vmatpush1.msra.mxu0 0.0
    %276 = vmatprep.subr.mxu0 0.0
    %277 = vmatpush1.msra.mxu0 0.0
    %278 = vmatprep.mubr.f32.mxu0 0.0
    %279 = vmatmul.mubr.f32.gmra.mrb[0].mxu0 %v203
    %v280 = vpop.f32.mrb[0].mxu0
    %v281 = vadd.f32 %v197, %v280
    %v282 = vpop.f32.mrb[0].mxu0
    %283 = vmatprep.mubr.f32.mxu0 0.0
    %284 = vmatmul.mubr.f32.gmra.mrb[0].mxu0 %v206
    %v285 = vpop.f32.mrb[0].mxu0
    %v286 = vadd.f32 %v198, %v285
    %v287 = vpop.f32.mrb[0].mxu0
    %288 = vmatprep.mubr.f32.mxu0 0.0
    %289 = vmatmul.mubr.f32.gmra.mrb[0].mxu0 %v209
    %v290 = vpop.f32.mrb[0].mxu0
    %v291 = vadd.f32 %v199, %v290
    %v292 = vpop.f32.mrb[0].mxu0
    %293 = vmatprep.mubr.f32.mxu0 0.0
    %294 = vmatmul.mubr.f32.gmra.mrb[0].mxu0 %v212
    %v295 = vpop.f32.mrb[0].mxu0
    %v296 = vadd.f32 %v200, %v295
    %v297 = vpop.f32.mrb[0].mxu0
    %298 = vdwg.mxu0
    %v299 = vld [vmem:[%s8] sm:$0xff]
    %v300 = vld [vmem:[%s8 + $0x8] sm:$0xff]
    %v301 = vld [vmem:[%s8 + $0x10] sm:$0xff]
    %v302 = vld [vmem:[%s8 + $0x18] sm:$0xff]
    %v303 = vld [vmem:[%s8 + $0x20] sm:$0xff]
    %v304 = vld [vmem:[%s8 + $0x28] sm:$0xff]
    %v305 = vld [vmem:[%s8 + $0x30] sm:$0xff]
    %v306 = vld [vmem:[%s8 + $0x38] sm:$0xff]
    %v307 = vmul.f32 %v151, %v299
    %v308 = vmul.f32 %v156, %v300
    %v309 = vmul.f32 %v161, %v301
    %v310 = vmul.f32 %v166, %v302
    %v311 = vmul.f32 %v171, %v303
    %v312 = vmul.f32 %v176, %v304
    %v313 = vmul.f32 %v181, %v305
    %v314 = vmul.f32 %v186, %v306
    %v315 = vld [vmem:[%s9] sm:$0xff]
    %v316 = vld [vmem:[%s9 + $0x8] sm:$0xff]
    %v317 = vld [vmem:[%s9 + $0x10] sm:$0xff]
    %v318 = vld [vmem:[%s9 + $0x18] sm:$0xff]
    %v319 = vld [vmem:[%s9 + $0x20] sm:$0xff]
    %v320 = vld [vmem:[%s9 + $0x28] sm:$0xff]
    %v321 = vld [vmem:[%s9 + $0x30] sm:$0xff]
    %v322 = vld [vmem:[%s9 + $0x38] sm:$0xff]
    %v324 = vsel %vm201, %v307, 0
    %v327 = vsel %vm201, %v308, 0
    %v330 = vsel %vm201, %v309, 0
    %v333 = vsel %vm201, %v310, 0
    %v336 = vsel %vm201, %v311, 0
    %v339 = vsel %vm201, %v312, 0
    %v342 = vsel %vm201, %v313, 0
    %v345 = vsel %vm201, %v314, 0
    %347 = vmatprep.subr.mxu0 0.0
    %348 = vmatpush1.msra.mxu0 %v281
    %349 = vmatprep.subr.mxu0 0.0
    %350 = vmatpush1.msra.mxu0 %v286
    %351 = vmatprep.subr.mxu0 0.0
    %352 = vmatpush1.msra.mxu0 %v291
    %353 = vmatprep.subr.mxu0 0.0
    %354 = vmatpush1.msra.mxu0 %v296
    %355 = vmatprep.subr.mxu0 0.0
    %356 = vmatpush1.msra.mxu0 0.0
    %357 = vmatprep.subr.mxu0 0.0
    %358 = vmatpush1.msra.mxu0 0.0
    %359 = vmatprep.subr.mxu0 0.0
    %360 = vmatpush1.msra.mxu0 0.0
    %361 = vmatprep.subr.mxu0 0.0
    %362 = vmatpush1.msra.mxu0 0.0
    %363 = vmatprep.subr.mxu0 0.0
    %364 = vmatpush1.msra.mxu0 0.0
    %365 = vmatprep.subr.mxu0 0.0
    %366 = vmatpush1.msra.mxu0 0.0
    %367 = vmatprep.subr.mxu0 0.0
    %368 = vmatpush1.msra.mxu0 0.0
    %369 = vmatprep.subr.mxu0 0.0
    %370 = vmatpush1.msra.mxu0 0.0
    %371 = vmatprep.subr.mxu0 0.0
    %372 = vmatpush1.msra.mxu0 0.0
    %373 = vmatprep.subr.mxu0 0.0
    %374 = vmatpush1.msra.mxu0 0.0
    %375 = vmatprep.subr.mxu0 0.0
    %376 = vmatpush1.msra.mxu0 0.0
    %377 = vmatprep.subr.mxu0 0.0
    %378 = vmatpush1.msra.mxu0 0.0
    %379 = vmatprep.subr.mxu0 0.0
    %380 = vmatpush1.msra.mxu0 0.0
    %381 = vmatprep.subr.mxu0 0.0
    %382 = vmatpush1.msra.mxu0 0.0
    %383 = vmatprep.subr.mxu0 0.0
    %384 = vmatpush1.msra.mxu0 0.0
    %385 = vmatprep.subr.mxu0 0.0
    %386 = vmatpush1.msra.mxu0 0.0
    %387 = vmatprep.subr.mxu0 0.0
    %388 = vmatpush1.msra.mxu0 0.0
    %389 = vmatprep.subr.mxu0 0.0
    %390 = vmatpush1.msra.mxu0 0.0
    %391 = vmatprep.subr.mxu0 0.0
    %392 = vmatpush1.msra.mxu0 0.0
    %393 = vmatprep.subr.mxu0 0.0
    %394 = vmatpush1.msra.mxu0 0.0
    %395 = vmatprep.subr.mxu0 0.0
    %396 = vmatpush1.msra.mxu0 0.0
    %397 = vmatprep.subr.mxu0 0.0
    %398 = vmatpush1.msra.mxu0 0.0
    %399 = vmatprep.subr.mxu0 0.0
    %400 = vmatpush1.msra.mxu0 0.0
    %401 = vmatprep.subr.mxu0 0.0
    %402 = vmatpush1.msra.mxu0 0.0
    %403 = vmatprep.subr.mxu0 0.0
    %404 = vmatpush1.msra.mxu0 0.0
    %405 = vmatprep.subr.mxu0 0.0
    %406 = vmatpush1.msra.mxu0 0.0
    %407 = vmatprep.subr.mxu0 0.0
    %408 = vmatpush1.msra.mxu0 0.0
    %409 = vmatprep.subr.mxu0 0.0
    %410 = vmatpush1.msra.mxu0 0.0
    %411 = vmatprep.mubr.f32.mxu0 0.0
    %412 = vmatmul.mubr.f32.gmra.mrb[0].mxu0 %v324
    %v413 = vpop.f32.mrb[0].mxu0
    %v414 = vadd.f32 %v315, %v413
    %v415 = vpop.f32.mrb[0].mxu0
    %416 = vmatprep.mubr.f32.mxu0 0.0
    %417 = vmatmul.mubr.f32.gmra.mrb[0].mxu0 %v327
    %v418 = vpop.f32.mrb[0].mxu0
    %v419 = vadd.f32 %v316, %v418
    %v420 = vpop.f32.mrb[0].mxu0
    %421 = vmatprep.mubr.f32.mxu0 0.0
    %422 = vmatmul.mubr.f32.gmra.mrb[0].mxu0 %v330
    %v423 = vpop.f32.mrb[0].mxu0
    %v424 = vadd.f32 %v317, %v423
    %v425 = vpop.f32.mrb[0].mxu0
    %426 = vmatprep.mubr.f32.mxu0 0.0
    %427 = vmatmul.mubr.f32.gmra.mrb[0].mxu0 %v333
    %v428 = vpop.f32.mrb[0].mxu0
    %v429 = vadd.f32 %v318, %v428
    %v430 = vpop.f32.mrb[0].mxu0
    %431 = vmatprep.mubr.f32.mxu0 0.0
    %432 = vmatmul.mubr.f32.gmra.mrb[0].mxu0 %v336
    %v433 = vpop.f32.mrb[0].mxu0
    %v434 = vadd.f32 %v319, %v433
    %v435 = vpop.f32.mrb[0].mxu0
    %436 = vmatprep.mubr.f32.mxu0 0.0
    %437 = vmatmul.mubr.f32.gmra.mrb[0].mxu0 %v339
    %v438 = vpop.f32.mrb[0].mxu0
    %v439 = vadd.f32 %v320, %v438
    %v440 = vpop.f32.mrb[0].mxu0
    %441 = vmatprep.mubr.f32.mxu0 0.0
    %442 = vmatmul.mubr.f32.gmra.mrb[0].mxu0 %v342
    %v443 = vpop.f32.mrb[0].mxu0
    %v444 = vadd.f32 %v321, %v443
    %v445 = vpop.f32.mrb[0].mxu0
    %446 = vmatprep.mubr.f32.mxu0 0.0
    %447 = vmatmul.mubr.f32.gmra.mrb[0].mxu0 %v345
    %v448 = vpop.f32.mrb[0].mxu0
    %v449 = vadd.f32 %v322, %v448
    %v450 = vpop.f32.mrb[0].mxu0
    %451 = vdwg.mxu0
    %vm452 = vcmask 130048
    %v453 = vsel %vm452, %v414, -inf
    %454 = vmax.xlane.f32.xlu0 %v453
    %v455 = vpop.xlane.xlu0 %454
    %v456 = vsel %vm452, %v419, -inf
    %457 = vmax.xlane.f32.xlu0 %v456
    %v458 = vpop.xlane.xlu0 %457
    %v459 = vsel %vm452, %v424, -inf
    %460 = vmax.xlane.f32.xlu0 %v459
    %v461 = vpop.xlane.xlu0 %460
    %v462 = vsel %vm452, %v429, -inf
    %463 = vmax.xlane.f32.xlu0 %v462
    %v464 = vpop.xlane.xlu0 %463
    %v465 = vsel %vm452, %v434, -inf
    %466 = vmax.xlane.f32.xlu0 %v465
    %v467 = vpop.xlane.xlu0 %466
    %v468 = vsel %vm452, %v439, -inf
    %469 = vmax.xlane.f32.xlu0 %v468
    %v470 = vpop.xlane.xlu0 %469
    %v471 = vsel %vm452, %v444, -inf
    %472 = vmax.xlane.f32.xlu0 %v471
    %v473 = vpop.xlane.xlu0 %472
    %v474 = vsel %vm452, %v449, -inf
    %475 = vmax.xlane.f32.xlu0 %v474
    %v476 = vpop.xlane.xlu0 %475
    %v477 = vsub.f32 %v414, %v455
    %v478 = vsub.f32 %v419, %v458
    %v479 = vsub.f32 %v424, %v461
    %v480 = vsub.f32 %v429, %v464
    %v481 = vsub.f32 %v434, %v467
    %v482 = vsub.f32 %v439, %v470
    %v483 = vsub.f32 %v444, %v473
    %v484 = vsub.f32 %v449, %v476
    %v485 = vmul.f32 %v477, 1.442695
    %v486 = vpow.pop %v485
    %v487 = vmul.f32 %v478, 1.442695
    %v488 = vpow.pop %v487
    %v489 = vmul.f32 %v479, 1.442695
    %v490 = vpow.pop %v489
    %v491 = vmul.f32 %v480, 1.442695
    %v492 = vpow.pop %v491
    %v493 = vmul.f32 %v481, 1.442695
    %v494 = vpow.pop %v493
    %v495 = vmul.f32 %v482, 1.442695
    %v496 = vpow.pop %v495
    %v497 = vmul.f32 %v483, 1.442695
    %v498 = vpow.pop %v497
    %v499 = vmul.f32 %v484, 1.442695
    %v500 = vpow.pop %v499
    %v501 = vsel %vm452, %v486, 0.0
    %502 = vadd.xlane.f32.xlu0 %v501
    %v503 = vpop.xlane.xlu0 %502
    %v504 = vsel %vm452, %v488, 0.0
    %505 = vadd.xlane.f32.xlu0 %v504
    %v506 = vpop.xlane.xlu0 %505
    %v507 = vsel %vm452, %v490, 0.0
    %508 = vadd.xlane.f32.xlu0 %v507
    %v509 = vpop.xlane.xlu0 %508
    %v510 = vsel %vm452, %v492, 0.0
    %511 = vadd.xlane.f32.xlu0 %v510
    %v512 = vpop.xlane.xlu0 %511
    %v513 = vsel %vm452, %v494, 0.0
    %514 = vadd.xlane.f32.xlu0 %v513
    %v515 = vpop.xlane.xlu0 %514
    %v516 = vsel %vm452, %v496, 0.0
    %517 = vadd.xlane.f32.xlu0 %v516
    %v518 = vpop.xlane.xlu0 %517
    %v519 = vsel %vm452, %v498, 0.0
    %520 = vadd.xlane.f32.xlu0 %v519
    %v521 = vpop.xlane.xlu0 %520
    %v522 = vsel %vm452, %v500, 0.0
    %523 = vadd.xlane.f32.xlu0 %v522
    %v524 = vpop.xlane.xlu0 %523
    %v525 = vrcp.pop %v503
    %v526 = vrcp.pop %v506
    %v527 = vrcp.pop %v509
    %v528 = vrcp.pop %v512
    %v529 = vrcp.pop %v515
    %v530 = vrcp.pop %v518
    %v531 = vrcp.pop %v521
    %v532 = vrcp.pop %v524
    %v533 = vmul.f32 %v486, %v525
    %v534 = vmul.f32 %v488, %v526
    %v535 = vmul.f32 %v490, %v527
    %v536 = vmul.f32 %v492, %v528
    %v537 = vmul.f32 %v494, %v529
    %v538 = vmul.f32 %v496, %v530
    %v539 = vmul.f32 %v498, %v531
    %v540 = vmul.f32 %v500, %v532
    %543 = vrot.lane.b32.xlu0 %v151, 96
    %v544 = vpop.permute.xlu0 %543
    %545 = vrot.lane.b32.xlu0 %v156, 96
    %v546 = vpop.permute.xlu0 %545
    %v550 = vsel %vm452, %v533, 0
    %v553 = vsel %vm452, %v534, 0
    %v556 = vsel %vm452, %v535, 0
    %v559 = vsel %vm452, %v536, 0
    %v562 = vsel %vm452, %v537, 0
    %v565 = vsel %vm452, %v538, 0
    %v568 = vsel %vm452, %v539, 0
    %v571 = vsel %vm452, %v540, 0
    %573 = vmatprep.subr.mxu0 0.0
    %574 = vmatpush1.msra.mxu0 %v544
    %575 = vmatprep.subr.mxu0 0.0
    %576 = vmatpush1.msra.mxu0 %v546
    %577 = vmatprep.subr.mxu0 0.0
    %578 = vmatpush1.msra.mxu0 0.0
    %579 = vmatprep.subr.mxu0 0.0
    %580 = vmatpush1.msra.mxu0 0.0
    %581 = vmatprep.subr.mxu0 0.0
    %582 = vmatpush1.msra.mxu0 0.0
    %583 = vmatprep.subr.mxu0 0.0
    %584 = vmatpush1.msra.mxu0 0.0
    %585 = vmatprep.subr.mxu0 0.0
    %586 = vmatpush1.msra.mxu0 0.0
    %587 = vmatprep.subr.mxu0 0.0
    %588 = vmatpush1.msra.mxu0 0.0
    %589 = vmatprep.subr.mxu0 0.0
    %590 = vmatpush1.msra.mxu0 0.0
    %591 = vmatprep.subr.mxu0 0.0
    %592 = vmatpush1.msra.mxu0 0.0
    %593 = vmatprep.subr.mxu0 0.0
    %594 = vmatpush1.msra.mxu0 0.0
    %595 = vmatprep.subr.mxu0 0.0
    %596 = vmatpush1.msra.mxu0 0.0
    %597 = vmatprep.subr.mxu0 0.0
    %598 = vmatpush1.msra.mxu0 0.0
    %599 = vmatprep.subr.mxu0 0.0
    %600 = vmatpush1.msra.mxu0 0.0
    %601 = vmatprep.subr.mxu0 0.0
    %602 = vmatpush1.msra.mxu0 0.0
    %603 = vmatprep.subr.mxu0 0.0
    %604 = vmatpush1.msra.mxu0 0.0
    %605 = vmatprep.subr.mxu0 0.0
    %606 = vmatpush1.msra.mxu0 0.0
    %607 = vmatprep.subr.mxu0 0.0
    %608 = vmatpush1.msra.mxu0 0.0
    %609 = vmatprep.subr.mxu0 0.0
    %610 = vmatpush1.msra.mxu0 0.0
    %611 = vmatprep.subr.mxu0 0.0
    %612 = vmatpush1.msra.mxu0 0.0
    %613 = vmatprep.subr.mxu0 0.0
    %614 = vmatpush1.msra.mxu0 0.0
    %615 = vmatprep.subr.mxu0 0.0
    %616 = vmatpush1.msra.mxu0 0.0
    %617 = vmatprep.subr.mxu0 0.0
    %618 = vmatpush1.msra.mxu0 0.0
    %619 = vmatprep.subr.mxu0 0.0
    %620 = vmatpush1.msra.mxu0 0.0
    %621 = vmatprep.subr.mxu0 0.0
    %622 = vmatpush1.msra.mxu0 0.0
    %623 = vmatprep.subr.mxu0 0.0
    %624 = vmatpush1.msra.mxu0 0.0
    %625 = vmatprep.subr.mxu0 0.0
    %626 = vmatpush1.msra.mxu0 0.0
    %627 = vmatprep.subr.mxu0 0.0
    %628 = vmatpush1.msra.mxu0 0.0
    %629 = vmatprep.subr.mxu0 0.0
    %630 = vmatpush1.msra.mxu0 0.0
    %631 = vmatprep.subr.mxu0 0.0
    %632 = vmatpush1.msra.mxu0 0.0
    %633 = vmatprep.subr.mxu0 0.0
    %634 = vmatpush1.msra.mxu0 0.0
    %635 = vmatprep.subr.mxu0 0.0
    %636 = vmatpush1.msra.mxu0 0.0
    %637 = vmatprep.mubr.f32.mxu0 0.0
    %638 = vmatmul.mubr.f32.gmra.mrb[0].mxu0 %v550
    %v639 = vpop.f32.mrb[0].mxu0
    %v640 = vadd.f32 0.0, %v639
    %v641 = vpop.f32.mrb[0].mxu0
    %642 = vmatprep.mubr.f32.mxu0 0.0
    %643 = vmatmul.mubr.f32.gmra.mrb[0].mxu0 %v553
    %v644 = vpop.f32.mrb[0].mxu0
    %v645 = vadd.f32 0.0, %v644
    %v646 = vpop.f32.mrb[0].mxu0
    %647 = vmatprep.mubr.f32.mxu0 0.0
    %648 = vmatmul.mubr.f32.gmra.mrb[0].mxu0 %v556
    %v649 = vpop.f32.mrb[0].mxu0
    %v650 = vadd.f32 0.0, %v649
    %v651 = vpop.f32.mrb[0].mxu0
    %652 = vmatprep.mubr.f32.mxu0 0.0
    %653 = vmatmul.mubr.f32.gmra.mrb[0].mxu0 %v559
    %v654 = vpop.f32.mrb[0].mxu0
    %v655 = vadd.f32 0.0, %v654
    %v656 = vpop.f32.mrb[0].mxu0
    %657 = vmatprep.mubr.f32.mxu0 0.0
    %658 = vmatmul.mubr.f32.gmra.mrb[0].mxu0 %v562
    %v659 = vpop.f32.mrb[0].mxu0
    %v660 = vadd.f32 0.0, %v659
    %v661 = vpop.f32.mrb[0].mxu0
    %662 = vmatprep.mubr.f32.mxu0 0.0
    %663 = vmatmul.mubr.f32.gmra.mrb[0].mxu0 %v565
    %v664 = vpop.f32.mrb[0].mxu0
    %v665 = vadd.f32 0.0, %v664
    %v666 = vpop.f32.mrb[0].mxu0
    %667 = vmatprep.mubr.f32.mxu0 0.0
    %668 = vmatmul.mubr.f32.gmra.mrb[0].mxu0 %v568
    %v669 = vpop.f32.mrb[0].mxu0
    %v670 = vadd.f32 0.0, %v669
    %v671 = vpop.f32.mrb[0].mxu0
    %672 = vmatprep.mubr.f32.mxu0 0.0
    %673 = vmatmul.mubr.f32.gmra.mrb[0].mxu0 %v571
    %v674 = vpop.f32.mrb[0].mxu0
    %v675 = vadd.f32 0.0, %v674
    %v676 = vpop.f32.mrb[0].mxu0
    %677 = vdwg.mxu0
    %v678 = vmul.f32 %v640, %v299
    %v679 = vmul.f32 %v645, %v300
    %v680 = vmul.f32 %v650, %v301
    %v681 = vmul.f32 %v655, %v302
    %v682 = vmul.f32 %v660, %v303
    %v683 = vmul.f32 %v665, %v304
    %v684 = vmul.f32 %v670, %v305
    %v685 = vmul.f32 %v675, %v306
    %v686 = vadd.f32 %v678, %v680
    %v687 = vadd.f32 %v679, %v681
    %v688 = vadd.f32 %v686, %v682
    %v689 = vadd.f32 %v687, %v683
    %v690 = vadd.f32 %v688, %v684
    %v691 = vadd.f32 %v689, %v685
    %v692 = vld [vmem:[%s6] sm:$0xff]
    %v693 = vld [vmem:[%s6 + $0x8] sm:$0xff]
    %v694 = vld [vmem:[%s6 + $0x10] sm:$0xff]
    %v695 = vld [vmem:[%s6 + $0x18] sm:$0xff]
    %v696 = vld [vmem:[%s7] sm:$0x1]
    %v698 = vlaneseq
    %v699 = vshrl.u32 %v698, 7
    %v700 = vsub.s32 0, %v699
    %v701 = vrot.slane %v696, %v700
    %v704 = vsel %vm201, %v690, 0
    %v707 = vsel %vm201, %v691, 0
    %709 = vmatprep.subr.mxu0 0.0
    %710 = vmatpush1.msra.mxu0 %v692
    %711 = vmatprep.subr.mxu0 0.0
    %712 = vmatpush1.msra.mxu0 %v693
    %713 = vmatprep.subr.mxu0 0.0
    %714 = vmatpush1.msra.mxu0 %v694
    %715 = vmatprep.subr.mxu0 0.0
    %716 = vmatpush1.msra.mxu0 %v695
    %717 = vmatprep.subr.mxu0 0.0
    %718 = vmatpush1.msra.mxu0 0.0
    %719 = vmatprep.subr.mxu0 0.0
    %720 = vmatpush1.msra.mxu0 0.0
    %721 = vmatprep.subr.mxu0 0.0
    %722 = vmatpush1.msra.mxu0 0.0
    %723 = vmatprep.subr.mxu0 0.0
    %724 = vmatpush1.msra.mxu0 0.0
    %725 = vmatprep.subr.mxu0 0.0
    %726 = vmatpush1.msra.mxu0 0.0
    %727 = vmatprep.subr.mxu0 0.0
    %728 = vmatpush1.msra.mxu0 0.0
    %729 = vmatprep.subr.mxu0 0.0
    %730 = vmatpush1.msra.mxu0 0.0
    %731 = vmatprep.subr.mxu0 0.0
    %732 = vmatpush1.msra.mxu0 0.0
    %733 = vmatprep.subr.mxu0 0.0
    %734 = vmatpush1.msra.mxu0 0.0
    %735 = vmatprep.subr.mxu0 0.0
    %736 = vmatpush1.msra.mxu0 0.0
    %737 = vmatprep.subr.mxu0 0.0
    %738 = vmatpush1.msra.mxu0 0.0
    %739 = vmatprep.subr.mxu0 0.0
    %740 = vmatpush1.msra.mxu0 0.0
    %741 = vmatprep.subr.mxu0 0.0
    %742 = vmatpush1.msra.mxu0 0.0
    %743 = vmatprep.subr.mxu0 0.0
    %744 = vmatpush1.msra.mxu0 0.0
    %745 = vmatprep.subr.mxu0 0.0
    %746 = vmatpush1.msra.mxu0 0.0
    %747 = vmatprep.subr.mxu0 0.0
    %748 = vmatpush1.msra.mxu0 0.0
    %749 = vmatprep.subr.mxu0 0.0
    %750 = vmatpush1.msra.mxu0 0.0
    %751 = vmatprep.subr.mxu0 0.0
    %752 = vmatpush1.msra.mxu0 0.0
    %753 = vmatprep.subr.mxu0 0.0
    %754 = vmatpush1.msra.mxu0 0.0
    %755 = vmatprep.subr.mxu0 0.0
    %756 = vmatpush1.msra.mxu0 0.0
    %757 = vmatprep.subr.mxu0 0.0
    %758 = vmatpush1.msra.mxu0 0.0
    %759 = vmatprep.subr.mxu0 0.0
    %760 = vmatpush1.msra.mxu0 0.0
    %761 = vmatprep.subr.mxu0 0.0
    %762 = vmatpush1.msra.mxu0 0.0
    %763 = vmatprep.subr.mxu0 0.0
    %764 = vmatpush1.msra.mxu0 0.0
    %765 = vmatprep.subr.mxu0 0.0
    %766 = vmatpush1.msra.mxu0 0.0
    %767 = vmatprep.subr.mxu0 0.0
    %768 = vmatpush1.msra.mxu0 0.0
    %769 = vmatprep.subr.mxu0 0.0
    %770 = vmatpush1.msra.mxu0 0.0
    %771 = vmatprep.subr.mxu0 0.0
    %772 = vmatpush1.msra.mxu0 0.0
    %773 = vmatprep.mubr.f32.mxu0 0.0
    %774 = vmatmul.mubr.f32.gmra.mrb[0].mxu0 %v704
    %v775 = vpop.f32.mrb[0].mxu0
    %v776 = vadd.f32 %v701, %v775
    %v777 = vpop.f32.mrb[0].mxu0
    %778 = vmatprep.mubr.f32.mxu0 0.0
    %779 = vmatmul.mubr.f32.gmra.mrb[0].mxu0 %v707
    %v780 = vpop.f32.mrb[0].mxu0
    %v781 = vadd.f32 %v701, %v780
    %v782 = vpop.f32.mrb[0].mxu0
    %783 = vdwg.mxu0
    %784 = vst.msk [vmem:[#allocation2] sm:$0xff] %vm201, %v776
    %785 = vst.msk [vmem:[#allocation2 + $0x8] sm:$0xff] %vm201, %v781
    // Predicated region
    $region42: #{multi_head_attention.1} parent=1 // pred_check
      _
    $region43: #{multi_head_attention.1} parent=1 // pred_check_branch
      %787 = sbr.rel (0) target = $region45
    $region44: #{multi_head_attention.1} parent=1 // pred_region
      %s789 = ssub.s32 256, 256
      %790 = vsyncadd [#allocation3], %s789
      %s791 = sshll.u32 [#allocation2], 4
      %s792 = int_to_ptr.vmem [resolvable:$true] %s791
      %797 = dma.vmem_to_hbm [thread:$0]  %s792, 256, %s10, [#allocation3], 128, 128, 8
    $region45: #{multi_head_attention.1} parent=1 // pred_fallthru
      _
    // Predicated region
    $region46: #{multi_head_attention.1} parent=1 // pred_check
      _
    $region47: #{multi_head_attention.1} parent=1 // pred_check_branch
      %799 = sbr.rel (0) target = $region49
    $region48: #{multi_head_attention.1} parent=1 // pred_region
      %800 = dma.done [#allocation3], 256
    $region49: #{multi_head_attention.1} parent=1 // pred_fallthru
      _
    %801 = vsyncpa [#allocation3], 1

</llo_original>
